<compile_context>
chip_gen: v5e
topology: v5e:2x2
jax: 0.10.0
libtpu: 0.0.40
codegen_flags: <defaults>
</compile_context>

<pallas_src>
import functools

import numpy as np
import jax
import jax.numpy as jnp
from jax.experimental import pallas as pl
from jax.experimental.pallas import tpu as pltpu


def _fused_kernel(key_ref, q_ref, o_ref, *, k, stride, h_out, w_out):
    """key_ref: (bt, k, Hp*w_out)   q_ref/o_ref: (bt, kk, L)."""
    L = h_out * w_out
    for kh in range(k):
        for kw in range(k):
            p = kh * k + kw
            if stride == 1:
                # im2col slab of patch (kh, kw), already in flattened (oh, ow)
                # output order: a single contiguous lane slice of the per-kw
                # column slice of the padded key.
                slab = key_ref[:, kw, pl.ds(kh * w_out, L)]          # (bt, L)
                # One full-width, offset-0 (lane-aligned) store per patch position.
                o_ref[:, p, :] = slab * q_ref[:, p, :]
            else:
                # TODO(synk): stride>1 fallback still assembles per output row
                # (narrow segment copies); only the stride==1 path is tuned.
                for oh in range(h_out):
                    src = (oh * stride + kh) * w_out
                    dst = oh * w_out
                    seg = key_ref[:, kw, pl.ds(src, w_out)]
                    o_ref[:, p, pl.ds(dst, w_out)] = (
                        seg * q_ref[:, p, pl.ds(dst, w_out)])


def _tiled_bytes(sub_dim, lane_dim, itemsize):
    """Bytes of a (sub_dim, lane_dim) VMEM slab after (8,128) tiling (dtype-packed)."""
    sub = 8 * max(1, 4 // itemsize)
    sub_pad = -(-sub_dim // sub) * sub
    lane_pad = -(-lane_dim // 128) * 128
    return sub_pad * lane_pad * itemsize


def appearance_composability(key_map, query_map, *, k, padding, stride):
    n, c, h, w = key_map.shape
    assert query_map.shape == key_map.shape
    kk = k * k
    center = kk // 2
    h_out = (h + 2 * padding - k) // stride + 1
    w_out = (w + 2 * padding - k) // stride + 1
    L = h_out * w_out
    nc = n * c
    dtype = key_map.dtype
    itemsize = np.dtype(dtype).itemsize
    hp, wp = h + 2 * padding, w + 2 * padding

    # ---- key: k column-decimated slices of the zero-padded key, lane-flattened ----
    # key_cols[b, kw, r*w_out + ow] = padded_key[b, r, ow*stride + kw]
    key_pad = jnp.pad(key_map.reshape(nc, h, w),
                      ((0, 0), (padding, padding), (padding, padding)))
    cols = [key_pad[:, :, kw: kw + (w_out - 1) * stride + 1: stride]
            for kw in range(k)]
    key_cols = jnp.stack(cols, axis=1).reshape(nc, k, hp * w_out)

    # ---- q_rep[b, p, l] = q_center[b, (p*L + l)//kk],  q_center[i] = F_q[i*kk+center]
    # (tiny static-index gather over the padded query + a uniform repeat)
    m = np.arange(L) * kk + center
    p_idx, l_idx = m // L, m % L
    oh_i, ow_i = l_idx // w_out, l_idx % w_out
    kh_i, kw_i = p_idx // k, p_idx % k
    flat_idx = (oh_i * stride + kh_i) * wp + (ow_i * stride + kw_i)
    q_pad = jnp.pad(query_map.reshape(nc, h, w),
                    ((0, 0), (padding, padding), (padding, padding))
                    ).reshape(nc, hp * wp)
    q_center = jnp.take(q_pad, jnp.asarray(flat_idx, dtype=jnp.int32), axis=1)
    q_rep = jnp.repeat(q_center, kk, axis=-1).reshape(nc, kk, L)

    # ---- block sizing: (8,128)-tiled sizes, 2x double-buffering, >=4 grid steps ----
    per_bt = (_tiled_bytes(k, hp * w_out, itemsize)      # key block, per channel
              + 2 * _tiled_bytes(kk, L, itemsize))       # q_rep + out blocks
    budget = 20 * 1024 * 1024                            # live blocks (<= ~40 MiB w/ 2x buf)
    cap = max(1, budget // (2 * per_bt))
    bt = int(min(cap, nc))
    if nc >= 4:
        bt = int(min(bt, max(1, nc // 4)))               # >=4 grid steps (v7x 2 TCs, overlap)
    grid = (pl.cdiv(nc, bt),)

    kernel = functools.partial(_fused_kernel, k=k, stride=stride,
                               h_out=h_out, w_out=w_out)

    out = pl.pallas_call(
        kernel,
        out_shape=jax.ShapeDtypeStruct((nc, kk, L), dtype),
        grid=grid,
        in_specs=[pl.BlockSpec((bt, k, hp * w_out), lambda i: (i, 0, 0)),
                  pl.BlockSpec((bt, kk, L), lambda i: (i, 0, 0))],
        out_specs=pl.BlockSpec((bt, kk, L), lambda i: (i, 0, 0)),
        compiler_params=pltpu.CompilerParams(
            dimension_semantics=("parallel",),
            vmem_limit_bytes=48 * 1024 * 1024),
    )(key_cols, q_rep)

    # PyTorch's `.view(N, C, -1, k*k)` is a flat reinterpretation per channel:
    # (kk, L) row-major flat == (L, kk) row-major flat.
    return out.reshape(n, c, L, kk)


def _reference(key_map, query_map, k, padding, stride):
    """Numpy replica of the PyTorch forward (Unfold -> view -> multiply)."""
    key_map = np.asarray(key_map)
    query_map = np.asarray(query_map)
    n, c, h, w = key_map.shape
    h_out = (h + 2 * padding - k) // stride + 1
    w_out = (w + 2 * padding - k) // stride + 1
    l = h_out * w_out
    kk = k * k

    def unfold(x):
        xp = np.pad(x, ((0, 0), (0, 0), (padding, padding), (padding, padding)))
        cols = np.empty((n, c, kk, l), x.dtype)
        for kh in range(k):
            for kw in range(k):
                patch = xp[:, :, kh: kh + (h_out - 1) * stride + 1: stride,
                           kw: kw + (w_out - 1) * stride + 1: stride]
                cols[:, :, kh * k + kw, :] = patch.reshape(n, c, l)
        return cols.reshape(n, c * kk, l)

    ku = unfold(key_map).reshape(n, c, l, kk)        # same semantics as torch .view
    qu = unfold(query_map).reshape(n, c, l, kk)
    return ku * qu[:, :, :, kk // 2: kk // 2 + 1]


if __name__ == "__main__":
    N, C, H, W = 2, 4, 16, 16
    rng = jax.random.PRNGKey(0)
    r1, r2 = jax.random.split(rng)
    key_map = jax.random.normal(r1, (N, C, H, W), jnp.float32)
    query_map = jax.random.normal(r2, (N, C, H, W), jnp.float32)

    # Primary config (fast path): k=3, padding=1, stride=1
    fn = jax.jit(functools.partial(appearance_composability,
                                   k=3, padding=1, stride=1))
    out = jax.block_until_ready(fn(key_map, query_map))
    ref = _reference(key_map, query_map, 3, 1, 1)
    assert out.shape == ref.shape, (out.shape, ref.shape)
    np.testing.assert_allclose(np.asarray(out), ref, rtol=1e-6, atol=1e-6)

    # Secondary config exercising the stride>1 fallback path
    fn2 = jax.jit(functools.partial(appearance_composability,
                                    k=3, padding=1, stride=2))
    out2 = jax.block_until_ready(fn2(key_map, query_map))
    ref2 = _reference(key_map, query_map, 3, 1, 2)
    assert out2.shape == ref2.shape, (out2.shape, ref2.shape)
    np.testing.assert_allclose(np.asarray(out2), ref2, rtol=1e-6, atol=1e-6)

    print("KERNEL_OK")
</pallas_src>

<mosaic_0001>
module attributes {stable_mosaic.version = 11 : i64} {
  func.func @_fused_kernel(%arg0: i32, %arg1: memref<2x3x288xf32, #tpu.memory_space<vmem>>, %arg2: memref<2x9x256xf32, #tpu.memory_space<vmem>>, %arg3: memref<2x9x256xf32, #tpu.memory_space<vmem>>) attributes {dimension_semantics = [#tpu.dimension_semantics<parallel>], iteration_bounds = array<i64: 4>, scalar_prefetch = 0 : i64, scratch_operands = 0 : i64, tpu.core_type = #tpu.core_type<tc>, window_params = [{transform_indices = @transform_0, window_bounds = array<i64: 2, 3, 288>}, {transform_indices = @transform_1, window_bounds = array<i64: 2, 9, 256>}, {transform_indices = @transform_2, window_bounds = array<i64: 2, 9, 256>}]} {
    %c0 = arith.constant 0 : index
    %c0_0 = arith.constant 0 : index
    %c0_1 = arith.constant 0 : index
    %0 = vector.load %arg1[%c0, %c0_0, %c0_1] : memref<2x3x288xf32, #tpu.memory_space<vmem>>, vector<2x1x256xf32>
    %1 = vector.shape_cast %0 : vector<2x1x256xf32> to vector<2x256xf32>
    %c0_2 = arith.constant 0 : index
    %c0_3 = arith.constant 0 : index
    %c0_4 = arith.constant 0 : index
    %2 = vector.load %arg2[%c0_2, %c0_3, %c0_4] : memref<2x9x256xf32, #tpu.memory_space<vmem>>, vector<2x1x256xf32>
    %3 = vector.shape_cast %2 : vector<2x1x256xf32> to vector<2x256xf32>
    %4 = arith.mulf %1, %3 : vector<2x256xf32>
    %c0_5 = arith.constant 0 : index
    %c0_6 = arith.constant 0 : index
    %c0_7 = arith.constant 0 : index
    %5 = vector.load %arg3[%c0_5, %c0_6, %c0_7] : memref<2x9x256xf32, #tpu.memory_space<vmem>>, vector<2x1x256xf32>
    %6 = vector.shape_cast %5 : vector<2x1x256xf32> to vector<2x256xf32>
    %7 = vector.shape_cast %4 : vector<2x256xf32> to vector<2x1x256xf32>
    tpu.vector_store %arg3[%c0_5, %c0_6, %c0_7], %7 {strides = array<i32>} : memref<2x9x256xf32, #tpu.memory_space<vmem>>, vector<2x1x256xf32>,
    %c0_8 = arith.constant 0 : index
    %c1 = arith.constant 1 : index
    %c0_9 = arith.constant 0 : index
    %8 = vector.load %arg1[%c0_8, %c1, %c0_9] : memref<2x3x288xf32, #tpu.memory_space<vmem>>, vector<2x1x256xf32>
    %9 = vector.shape_cast %8 : vector<2x1x256xf32> to vector<2x256xf32>
    %c0_10 = arith.constant 0 : index
    %c1_11 = arith.constant 1 : index
    %c0_12 = arith.constant 0 : index
    %10 = vector.load %arg2[%c0_10, %c1_11, %c0_12] : memref<2x9x256xf32, #tpu.memory_space<vmem>>, vector<2x1x256xf32>
    %11 = vector.shape_cast %10 : vector<2x1x256xf32> to vector<2x256xf32>
    %12 = arith.mulf %9, %11 : vector<2x256xf32>
    %c0_13 = arith.constant 0 : index
    %c1_14 = arith.constant 1 : index
    %c0_15 = arith.constant 0 : index
    %13 = vector.load %arg3[%c0_13, %c1_14, %c0_15] : memref<2x9x256xf32, #tpu.memory_space<vmem>>, vector<2x1x256xf32>
    %14 = vector.shape_cast %13 : vector<2x1x256xf32> to vector<2x256xf32>
    %15 = vector.shape_cast %12 : vector<2x256xf32> to vector<2x1x256xf32>
    tpu.vector_store %arg3[%c0_13, %c1_14, %c0_15], %15 {strides = array<i32>} : memref<2x9x256xf32, #tpu.memory_space<vmem>>, vector<2x1x256xf32>,
    %c0_16 = arith.constant 0 : index
    %c2 = arith.constant 2 : index
    %c0_17 = arith.constant 0 : index
    %16 = vector.load %arg1[%c0_16, %c2, %c0_17] : memref<2x3x288xf32, #tpu.memory_space<vmem>>, vector<2x1x256xf32>
    %17 = vector.shape_cast %16 : vector<2x1x256xf32> to vector<2x256xf32>
    %c0_18 = arith.constant 0 : index
    %c2_19 = arith.constant 2 : index
    %c0_20 = arith.constant 0 : index
    %18 = vector.load %arg2[%c0_18, %c2_19, %c0_20] : memref<2x9x256xf32, #tpu.memory_space<vmem>>, vector<2x1x256xf32>
    %19 = vector.shape_cast %18 : vector<2x1x256xf32> to vector<2x256xf32>
    %20 = arith.mulf %17, %19 : vector<2x256xf32>
    %c0_21 = arith.constant 0 : index
    %c2_22 = arith.constant 2 : index
    %c0_23 = arith.constant 0 : index
    %21 = vector.load %arg3[%c0_21, %c2_22, %c0_23] : memref<2x9x256xf32, #tpu.memory_space<vmem>>, vector<2x1x256xf32>
    %22 = vector.shape_cast %21 : vector<2x1x256xf32> to vector<2x256xf32>
    %23 = vector.shape_cast %20 : vector<2x256xf32> to vector<2x1x256xf32>
    tpu.vector_store %arg3[%c0_21, %c2_22, %c0_23], %23 {strides = array<i32>} : memref<2x9x256xf32, #tpu.memory_space<vmem>>, vector<2x1x256xf32>,
    %c0_24 = arith.constant 0 : index
    %c0_25 = arith.constant 0 : index
    %c16 = arith.constant 16 : index
    %24 = vector.load %arg1[%c0_24, %c0_25, %c16] : memref<2x3x288xf32, #tpu.memory_space<vmem>>, vector<2x1x256xf32>
    %25 = vector.shape_cast %24 : vector<2x1x256xf32> to vector<2x256xf32>
    %c0_26 = arith.constant 0 : index
    %c3 = arith.constant 3 : index
    %c0_27 = arith.constant 0 : index
    %26 = vector.load %arg2[%c0_26, %c3, %c0_27] : memref<2x9x256xf32, #tpu.memory_space<vmem>>, vector<2x1x256xf32>
    %27 = vector.shape_cast %26 : vector<2x1x256xf32> to vector<2x256xf32>
    %28 = arith.mulf %25, %27 : vector<2x256xf32>
    %c0_28 = arith.constant 0 : index
    %c3_29 = arith.constant 3 : index
    %c0_30 = arith.constant 0 : index
    %29 = vector.load %arg3[%c0_28, %c3_29, %c0_30] : memref<2x9x256xf32, #tpu.memory_space<vmem>>, vector<2x1x256xf32>
    %30 = vector.shape_cast %29 : vector<2x1x256xf32> to vector<2x256xf32>
    %31 = vector.shape_cast %28 : vector<2x256xf32> to vector<2x1x256xf32>
    tpu.vector_store %arg3[%c0_28, %c3_29, %c0_30], %31 {strides = array<i32>} : memref<2x9x256xf32, #tpu.memory_space<vmem>>, vector<2x1x256xf32>,
    %c0_31 = arith.constant 0 : index
    %c1_32 = arith.constant 1 : index
    %c16_33 = arith.constant 16 : index
    %32 = vector.load %arg1[%c0_31, %c1_32, %c16_33] : memref<2x3x288xf32, #tpu.memory_space<vmem>>, vector<2x1x256xf32>
    %33 = vector.shape_cast %32 : vector<2x1x256xf32> to vector<2x256xf32>
    %c0_34 = arith.constant 0 : index
    %c4 = arith.constant 4 : index
    %c0_35 = arith.constant 0 : index
    %34 = vector.load %arg2[%c0_34, %c4, %c0_35] : memref<2x9x256xf32, #tpu.memory_space<vmem>>, vector<2x1x256xf32>
    %35 = vector.shape_cast %34 : vector<2x1x256xf32> to vector<2x256xf32>
    %36 = arith.mulf %33, %35 : vector<2x256xf32>
    %c0_36 = arith.constant 0 : index
    %c4_37 = arith.constant 4 : index
    %c0_38 = arith.constant 0 : index
    %37 = vector.load %arg3[%c0_36, %c4_37, %c0_38] : memref<2x9x256xf32, #tpu.memory_space<vmem>>, vector<2x1x256xf32>
    %38 = vector.shape_cast %37 : vector<2x1x256xf32> to vector<2x256xf32>
    %39 = vector.shape_cast %36 : vector<2x256xf32> to vector<2x1x256xf32>
    tpu.vector_store %arg3[%c0_36, %c4_37, %c0_38], %39 {strides = array<i32>} : memref<2x9x256xf32, #tpu.memory_space<vmem>>, vector<2x1x256xf32>,
    %c0_39 = arith.constant 0 : index
    %c2_40 = arith.constant 2 : index
    %c16_41 = arith.constant 16 : index
    %40 = vector.load %arg1[%c0_39, %c2_40, %c16_41] : memref<2x3x288xf32, #tpu.memory_space<vmem>>, vector<2x1x256xf32>
    %41 = vector.shape_cast %40 : vector<2x1x256xf32> to vector<2x256xf32>
    %c0_42 = arith.constant 0 : index
    %c5 = arith.constant 5 : index
    %c0_43 = arith.constant 0 : index
    %42 = vector.load %arg2[%c0_42, %c5, %c0_43] : memref<2x9x256xf32, #tpu.memory_space<vmem>>, vector<2x1x256xf32>
    %43 = vector.shape_cast %42 : vector<2x1x256xf32> to vector<2x256xf32>
    %44 = arith.mulf %41, %43 : vector<2x256xf32>
    %c0_44 = arith.constant 0 : index
    %c5_45 = arith.constant 5 : index
    %c0_46 = arith.constant 0 : index
    %45 = vector.load %arg3[%c0_44, %c5_45, %c0_46] : memref<2x9x256xf32, #tpu.memory_space<vmem>>, vector<2x1x256xf32>
    %46 = vector.shape_cast %45 : vector<2x1x256xf32> to vector<2x256xf32>
    %47 = vector.shape_cast %44 : vector<2x256xf32> to vector<2x1x256xf32>
    tpu.vector_store %arg3[%c0_44, %c5_45, %c0_46], %47 {strides = array<i32>} : memref<2x9x256xf32, #tpu.memory_space<vmem>>, vector<2x1x256xf32>,
    %c0_47 = arith.constant 0 : index
    %c0_48 = arith.constant 0 : index
    %c32 = arith.constant 32 : index
    %48 = vector.load %arg1[%c0_47, %c0_48, %c32] : memref<2x3x288xf32, #tpu.memory_space<vmem>>, vector<2x1x256xf32>
    %49 = vector.shape_cast %48 : vector<2x1x256xf32> to vector<2x256xf32>
    %c0_49 = arith.constant 0 : index
    %c6 = arith.constant 6 : index
    %c0_50 = arith.constant 0 : index
    %50 = vector.load %arg2[%c0_49, %c6, %c0_50] : memref<2x9x256xf32, #tpu.memory_space<vmem>>, vector<2x1x256xf32>
    %51 = vector.shape_cast %50 : vector<2x1x256xf32> to vector<2x256xf32>
    %52 = arith.mulf %49, %51 : vector<2x256xf32>
    %c0_51 = arith.constant 0 : index
    %c6_52 = arith.constant 6 : index
    %c0_53 = arith.constant 0 : index
    %53 = vector.load %arg3[%c0_51, %c6_52, %c0_53] : memref<2x9x256xf32, #tpu.memory_space<vmem>>, vector<2x1x256xf32>
    %54 = vector.shape_cast %53 : vector<2x1x256xf32> to vector<2x256xf32>
    %55 = vector.shape_cast %52 : vector<2x256xf32> to vector<2x1x256xf32>
    tpu.vector_store %arg3[%c0_51, %c6_52, %c0_53], %55 {strides = array<i32>} : memref<2x9x256xf32, #tpu.memory_space<vmem>>, vector<2x1x256xf32>,
    %c0_54 = arith.constant 0 : index
    %c1_55 = arith.constant 1 : index
    %c32_56 = arith.constant 32 : index
    %56 = vector.load %arg1[%c0_54, %c1_55, %c32_56] : memref<2x3x288xf32, #tpu.memory_space<vmem>>, vector<2x1x256xf32>
    %57 = vector.shape_cast %56 : vector<2x1x256xf32> to vector<2x256xf32>
    %c0_57 = arith.constant 0 : index
    %c7 = arith.constant 7 : index
    %c0_58 = arith.constant 0 : index
    %58 = vector.load %arg2[%c0_57, %c7, %c0_58] : memref<2x9x256xf32, #tpu.memory_space<vmem>>, vector<2x1x256xf32>
    %59 = vector.shape_cast %58 : vector<2x1x256xf32> to vector<2x256xf32>
    %60 = arith.mulf %57, %59 : vector<2x256xf32>
    %c0_59 = arith.constant 0 : index
    %c7_60 = arith.constant 7 : index
    %c0_61 = arith.constant 0 : index
    %61 = vector.load %arg3[%c0_59, %c7_60, %c0_61] : memref<2x9x256xf32, #tpu.memory_space<vmem>>, vector<2x1x256xf32>
    %62 = vector.shape_cast %61 : vector<2x1x256xf32> to vector<2x256xf32>
    %63 = vector.shape_cast %60 : vector<2x256xf32> to vector<2x1x256xf32>
    tpu.vector_store %arg3[%c0_59, %c7_60, %c0_61], %63 {strides = array<i32>} : memref<2x9x256xf32, #tpu.memory_space<vmem>>, vector<2x1x256xf32>,
    %c0_62 = arith.constant 0 : index
    %c2_63 = arith.constant 2 : index
    %c32_64 = arith.constant 32 : index
    %64 = vector.load %arg1[%c0_62, %c2_63, %c32_64] : memref<2x3x288xf32, #tpu.memory_space<vmem>>, vector<2x1x256xf32>
    %65 = vector.shape_cast %64 : vector<2x1x256xf32> to vector<2x256xf32>
    %c0_65 = arith.constant 0 : index
    %c8 = arith.constant 8 : index
    %c0_66 = arith.constant 0 : index
    %66 = vector.load %arg2[%c0_65, %c8, %c0_66] : memref<2x9x256xf32, #tpu.memory_space<vmem>>, vector<2x1x256xf32>
    %67 = vector.shape_cast %66 : vector<2x1x256xf32> to vector<2x256xf32>
    %68 = arith.mulf %65, %67 : vector<2x256xf32>
    %c0_67 = arith.constant 0 : index
    %c8_68 = arith.constant 8 : index
    %c0_69 = arith.constant 0 : index
    %69 = vector.load %arg3[%c0_67, %c8_68, %c0_69] : memref<2x9x256xf32, #tpu.memory_space<vmem>>, vector<2x1x256xf32>
    %70 = vector.shape_cast %69 : vector<2x1x256xf32> to vector<2x256xf32>
    %71 = vector.shape_cast %68 : vector<2x256xf32> to vector<2x1x256xf32>
    tpu.vector_store %arg3[%c0_67, %c8_68, %c0_69], %71 {strides = array<i32>} : memref<2x9x256xf32, #tpu.memory_space<vmem>>, vector<2x1x256xf32>,
    return
  }
  func.func @transform_0(%arg0: i32) -> (i32, i32, i32) {
    %c0_i32 = arith.constant 0 : i32
    %c0_i32_0 = arith.constant 0 : i32
    %c0_i32_1 = arith.constant 0 : i32
    return %arg0, %c0_i32, %c0_i32_0 : i32, i32, i32
  }
  func.func @transform_1(%arg0: i32) -> (i32, i32, i32) {
    %c0_i32 = arith.constant 0 : i32
    %c0_i32_0 = arith.constant 0 : i32
    %c0_i32_1 = arith.constant 0 : i32
    return %arg0, %c0_i32, %c0_i32_0 : i32, i32, i32
  }
  func.func @transform_2(%arg0: i32) -> (i32, i32, i32) {
    %c0_i32 = arith.constant 0 : i32
    %c0_i32_0 = arith.constant 0 : i32
    %c0_i32_1 = arith.constant 0 : i32
    return %arg0, %c0_i32, %c0_i32_0 : i32, i32, i32
  }
}

</mosaic_0001>

<llo_original>
// kernel: appearance_composability.1
$region0: #{appearance_composability.1}
  #allocation0 [shape = 'u32[]', space=smem, size = 0x4, offset = 0x4, fixed_abs, tag = 'smem constant byte address 0x4 - core index']
  #allocation1 [shape = 'u32[72,128]{1,0:T(1,128)}', space=vmem, size = 0x9000, scoped, tag = 'internal scratch']
  %s0 = inlined_call_operand.vmem [shape: f32[8,3,288], index: 0, kind: input, shape index: {}]
  %s1 = inlined_call_operand.vmem [shape: f32[8,9,256], index: 1, kind: input, shape index: {}]
  %s2 = inlined_call_operand.vmem [shape: f32[8,9,256], index: 2, kind: output, shape index: {}]
  %s3 = sld [smem:[#allocation0]]
  $region41: #{appearance_composability.1} parent=0
    _
  %s5 = ssub.s32 1, %s3
  %s6 = scalar_select 0, %s5, %s3
  loop: start=0, step=1, limit=6
  $region2: #{appearance_composability.1} parent=0 // loop_pre_header
    _
  $region3: #{appearance_composability.1} parent=0 // loop_header
    %s8 = sphi 0, %s12
    %p9 = scmp.ge.s32.totalorder %s8, 6
    %s18 = sphi 0, %s20
    %s21 = sphi 0, %s18
    %s22 = sphi 0, %s21
    %s38 = sphi 0, %s22
    %s44 = sphi 0, %s46
    %s47 = sphi 0, %s44
    %s48 = sphi 0, %s47
    %s64 = sphi 0, %s48
    %s70 = sphi 0, %s72
    %s73 = sphi 0, %s70
    %s74 = sphi 0, %s73
    %s90 = sphi 0, %s74
  $region4: #{appearance_composability.1} parent=0 // loop_header_branch
    %11 = sbr.rel (%p9) target = $region8
  $region5: #{appearance_composability.1} parent=0 // loop_body
    %s13 = ssub.s32 %s8, 1
    %s14 = ssub.s32 %s8, 2
    %s15 = sadd.s32 %s8, 1
    %s16 = ssub.s32 %s8, %s15
    %p17 = scmp.eq.s32.totalorder %s16, 0
    %s19 = sadd.s32 %s18, 1
    %s20 = scalar_select %p17, %s18, %s19
    %p23 = pneg %p17
    %p24 = scmp.eq.s32.totalorder %s8, 3
    %p25 = por %p23, %p24
    %p26 = scmp.ne.s32.totalorder %s18, %s21
    %p27 = scmp.eq.s32.totalorder %s8, 0
    %p28 = por %p26, %p27
    %p29 = scmp.ne.s32.totalorder %s18, %s21
    %p30 = scmp.eq.s32.totalorder %s13, 3
    %p31 = por %p29, %p30
    %p32 = scmp.ne.s32.totalorder %s21, %s22
    %p33 = scmp.eq.s32.totalorder %s13, 0
    %p34 = por %p32, %p33
    %p35 = scmp.ne.s32.totalorder %s21, %s22
    %p36 = scmp.eq.s32.totalorder %s14, 3
    %p37 = por %p35, %p36
    %p39 = scmp.ne.s32.totalorder %s22, %s38
    %p40 = scmp.eq.s32.totalorder %s14, 0
    %p41 = por %p39, %p40
    %s42 = ssub.s32 %s8, %s15
    %p43 = scmp.eq.s32.totalorder %s42, 0
    %s45 = sadd.s32 %s44, 1
    %s46 = scalar_select %p43, %s44, %s45
    %p49 = pneg %p43
    %p50 = scmp.eq.s32.totalorder %s8, 3
    %p51 = por %p49, %p50
    %p52 = scmp.ne.s32.totalorder %s44, %s47
    %p53 = scmp.eq.s32.totalorder %s8, 0
    %p54 = por %p52, %p53
    %p55 = scmp.ne.s32.totalorder %s44, %s47
    %p56 = scmp.eq.s32.totalorder %s13, 3
    %p57 = por %p55, %p56
    %p58 = scmp.ne.s32.totalorder %s47, %s48
    %p59 = scmp.eq.s32.totalorder %s13, 0
    %p60 = por %p58, %p59
    %p61 = scmp.ne.s32.totalorder %s47, %s48
    %p62 = scmp.eq.s32.totalorder %s14, 3
    %p63 = por %p61, %p62
    %p65 = scmp.ne.s32.totalorder %s48, %s64
    %p66 = scmp.eq.s32.totalorder %s14, 0
    %p67 = por %p65, %p66
    %s68 = ssub.s32 %s8, %s15
    %p69 = scmp.eq.s32.totalorder %s68, 0
    %s71 = sadd.s32 %s70, 1
    %s72 = scalar_select %p69, %s70, %s71
    %p75 = pneg %p69
    %p76 = scmp.eq.s32.totalorder %s8, 3
    %p77 = por %p75, %p76
    %p78 = scmp.ne.s32.totalorder %s70, %s73
    %p79 = scmp.eq.s32.totalorder %s8, 0
    %p80 = por %p78, %p79
    %p81 = scmp.ne.s32.totalorder %s70, %s73
    %p82 = scmp.eq.s32.totalorder %s13, 3
    %p83 = por %p81, %p82
    %p84 = scmp.ne.s32.totalorder %s73, %s74
    %p85 = scmp.eq.s32.totalorder %s13, 0
    %p86 = por %p84, %p85
    %p87 = scmp.ne.s32.totalorder %s73, %s74
    %p88 = scmp.eq.s32.totalorder %s14, 3
    %p89 = por %p87, %p88
    %p91 = scmp.ne.s32.totalorder %s74, %s90
    %p92 = scmp.eq.s32.totalorder %s14, 0
    %p93 = por %p91, %p92
    %p94 = scmp.le.s32.totalorder 1, %s8
    %p95 = scmp.lt.s32.totalorder %s8, 5
    %p96 = pnand %p94, %p95
    %p97 = pneg %p96
    // Predicated region
    $region9: #{appearance_composability.1} parent=5 // pred_check
      _
    $region10: #{appearance_composability.1} parent=5 // pred_check_branch
      %99 = sbr.rel (%p96) target = $region12
    $region11: #{appearance_composability.1} parent=5 // pred_region
      %s100 = ssub.s32 %s8, 1
    $region12: #{appearance_composability.1} parent=5 // pred_fallthru
      _
    %p101 = scmp.lt.s32.totalorder %s8, 4
    // Predicated region
    $region13: #{appearance_composability.1} parent=5 // pred_check
      %p102 = pneg %p101
    $region14: #{appearance_composability.1} parent=5 // pred_check_branch
      %104 = sbr.rel (%p102) target = $region16
    $region15: #{appearance_composability.1} parent=5 // pred_region
      // Predicated region
      $region17: #{appearance_composability.1} parent=15 // pred_check
        %p105 = pneg %p28
      $region18: #{appearance_composability.1} parent=15 // pred_check_branch
        %107 = sbr.rel (%p105) target = $region20
      $region19: #{appearance_composability.1} parent=15 // pred_region
        %s108 = smul.u32 2, %s8
        %p109 = scmp.lt.s32.totalorder %s108, 7
        %s110 = scalar_select %p109, %s108, 7
        %s111 = smul.addr %s110, 3
        %s112 = smul.addr %s111, 4
        %s113 = scalar_lea.vmem %s0, %s112
        %s114 = smul.u32 2, %s8
      $region20: #{appearance_composability.1} parent=15 // pred_fallthru
        _
      // Predicated region
      $region21: #{appearance_composability.1} parent=15 // pred_check
        %p115 = pneg %p54
      $region22: #{appearance_composability.1} parent=15 // pred_check_branch
        %117 = sbr.rel (%p115) target = $region24
      $region23: #{appearance_composability.1} parent=15 // pred_region
        %s118 = smul.u32 2, %s8
        %p119 = scmp.lt.s32.totalorder %s118, 7
        %s120 = scalar_select %p119, %s118, 7
        %s121 = smul.addr %s120, 4
        %s122 = smul.addr %s121, 8
        %s123 = scalar_lea.vmem %s1, %s122
        %s124 = smul.u32 2, %s8
      $region24: #{appearance_composability.1} parent=15 // pred_fallthru
        _
    $region16: #{appearance_composability.1} parent=5 // pred_fallthru
      _
    %p125 = scmp.le.s32.totalorder 1, %s8
    %p126 = scmp.lt.s32.totalorder %s8, 5
    %p127 = pnand %p125, %p126
    %p128 = pneg %p127
    // Predicated region
    $region25: #{appearance_composability.1} parent=5 // pred_check
      _
    $region26: #{appearance_composability.1} parent=5 // pred_check_branch
      %130 = sbr.rel (%p127) target = $region28
    $region27: #{appearance_composability.1} parent=5 // pred_region
      %s131 = ssub.s32 %s8, 1
      %s132 = smul.u32 2, %s13
      %p133 = scmp.lt.s32.totalorder %s132, 7
      %s134 = scalar_select %p133, %s132, 7
      %s135 = smul.addr %s134, 3
      %s136 = smul.addr %s135, 4
      %s137 = scalar_lea.vmem %s0, %s136
      %p138 = pneg %p34
      %p139 = pneg %p31
      %s140 = smul.u32 2, %s13
      %p141 = scmp.lt.s32.totalorder %s140, 7
      %s142 = scalar_select %p141, %s140, 7
      %s143 = smul.addr %s142, 4
      %s144 = smul.addr %s143, 8
      %s145 = scalar_lea.vmem %s1, %s144
      %p146 = pneg %p60
      %p147 = pneg %p57
      %p148 = pneg %p86
      %p149 = pneg %p83
      %s150 = smul.u32 2, %s13
      %p151 = scmp.lt.s32.totalorder %s150, 7
      %s152 = scalar_select %p151, %s150, 7
      %s153 = smul.addr %s152, 4
      %s154 = smul.addr %s153, 8
      %s155 = scalar_lea.vmem %s2, %s154
      %s156 = smul.u32 2, %s13
      %p157 = scmp.lt.s32.totalorder %s156, 7
      %s158 = scalar_select %p157, %s156, 7
      %s159 = smul.addr %s158, 3
      %s160 = smul.addr %s159, 4
      %s161 = scalar_lea.vmem %s0, %s160
      %s162 = smul.u32 2, %s13
      %s163 = smul.u32 2, %s13
      %p164 = scmp.lt.s32.totalorder %s163, 7
      %s165 = scalar_select %p164, %s163, 7
      %s166 = smul.addr %s165, 4
      %s167 = smul.addr %s166, 8
      %s168 = scalar_lea.vmem %s1, %s167
      %s169 = smul.u32 2, %s13
      %s170 = smul.u32 2, %s13
      %p171 = scmp.lt.s32.totalorder %s170, 7
      %s172 = scalar_select %p171, %s170, 7
      %s173 = smul.addr %s172, 4
      %s174 = smul.addr %s173, 8
      %s175 = scalar_lea.vmem %s2, %s174
      %s176 = smul.u32 2, %s13
      %v177 = vld [vmem:[%s161] ss:$4 sm:$0x3]
      %s178 = scalar_lea.vmem %s161, 12
      %v179 = vld [vmem:[%s178] ss:$4 sm:$0x3]
      %v180 = vld [vmem:[%s168] ss:$8 sm:$0x3]
      %s181 = scalar_lea.vmem %s168, 32
      %v182 = vld [vmem:[%s181] ss:$8 sm:$0x3]
      %v183 = vmul.f32 %v177, %v180
      %v184 = vmul.f32 %v179, %v182
      %v185 = vlaneseq
      %vm186 = vcmp.ge.s32.totalorder %v185, 0
      %vm187 = vcmp.lt.s32.totalorder %v185, 256
      %vm188 = vmand %vm186, %vm187
      %189 = vst.msk [vmem:[%s175] ss:$8 sm:$0x3] %vm188, %v183
      %190 = vst.msk [vmem:[%s175] ss:$8 sm:$0x0] %vm188, %v183
      %s191 = scalar_lea.vmem %s175, 32
      %192 = vst.msk [vmem:[%s191] ss:$8 sm:$0x3] %vm188, %v184
      %193 = vst.msk [vmem:[%s191] ss:$8 sm:$0x0] %vm188, %v184
      %s194 = scalar_lea.vmem %s161, 1
      %v195 = vld [vmem:[%s194] ss:$4 sm:$0x3]
      %s196 = scalar_lea.vmem %s161, 13
      %v197 = vld [vmem:[%s196] ss:$4 sm:$0x3]
      %s198 = scalar_lea.vmem %s168, 1
      %v199 = vld [vmem:[%s198] ss:$8 sm:$0x3]
      %s200 = scalar_lea.vmem %s168, 33
      %v201 = vld [vmem:[%s200] ss:$8 sm:$0x3]
      %v202 = vmul.f32 %v195, %v199
      %v203 = vmul.f32 %v197, %v201
      %s204 = scalar_lea.vmem %s175, 1
      %205 = vst.msk [vmem:[%s204] ss:$8 sm:$0x3] %vm188, %v202
      %206 = vst.msk [vmem:[%s204] ss:$8 sm:$0x0] %vm188, %v202
      %s207 = scalar_lea.vmem %s175, 33
      %208 = vst.msk [vmem:[%s207] ss:$8 sm:$0x3] %vm188, %v203
      %209 = vst.msk [vmem:[%s207] ss:$8 sm:$0x0] %vm188, %v203
      %s210 = scalar_lea.vmem %s161, 2
      %v211 = vld [vmem:[%s210] ss:$4 sm:$0x3]
      %s212 = scalar_lea.vmem %s161, 14
      %v213 = vld [vmem:[%s212] ss:$4 sm:$0x3]
      %s214 = scalar_lea.vmem %s168, 2
      %v215 = vld [vmem:[%s214] ss:$8 sm:$0x3]
      %s216 = scalar_lea.vmem %s168, 34
      %v217 = vld [vmem:[%s216] ss:$8 sm:$0x3]
      %v218 = vmul.f32 %v211, %v215
      %v219 = vmul.f32 %v213, %v217
      %s220 = scalar_lea.vmem %s175, 2
      %221 = vst.msk [vmem:[%s220] ss:$8 sm:$0x3] %vm188, %v218
      %222 = vst.msk [vmem:[%s220] ss:$8 sm:$0x0] %vm188, %v218
      %s223 = scalar_lea.vmem %s175, 34
      %224 = vst.msk [vmem:[%s223] ss:$8 sm:$0x3] %vm188, %v219
      %225 = vst.msk [vmem:[%s223] ss:$8 sm:$0x0] %vm188, %v219
      %v226 = vld [vmem:[%s161] ss:$4 sm:$0x7]
      %v227 = vld [vmem:[%s178] ss:$4 sm:$0x7]
      %s228 = scalar_lea.vmem %s168, 3
      %v229 = vld [vmem:[%s228] ss:$8 sm:$0x3]
      %s230 = scalar_lea.vmem %s168, 35
      %v231 = vld [vmem:[%s230] ss:$8 sm:$0x3]
      %234 = vrot.lane.b32.xlu0 %v229, 16
      %v235 = vpop.permute.xlu0 %234
      %236 = vrot.lane.b32.xlu0 %v231, 16
      %v237 = vpop.permute.xlu0 %236
      %v238 = vrot.slane %v235, 7
      %v239 = vrot.slane %v237, 7
      %vm240 = vcmask 130048
      %v241 = vsel %vm240, %v238, %v235
      %v242 = vsel %vm240, %v239, %v237
      %v245 = vmul.f32 %v226, %v241
      %v246 = vmul.f32 %v227, %v242
      %249 = vrot.lane.b32.xlu0 %v245, 112
      %v250 = vpop.permute.xlu0 %249
      %251 = vrot.lane.b32.xlu0 %v246, 112
      %v252 = vpop.permute.xlu0 %251
      %v253 = vrot.slane %v250, 1
      %v254 = vrot.slane %v252, 1
      %vm255 = vcmask 916480
      %v256 = vsel %vm255, %v250, %v253
      %v257 = vsel %vm255, %v252, %v254
      %s260 = scalar_lea.vmem %s175, 3
      %261 = vst.msk [vmem:[%s260] ss:$8 sm:$0x3] %vm188, %v256
      %262 = vst.msk [vmem:[%s260] ss:$8 sm:$0x0] %vm188, %v256
      %s263 = scalar_lea.vmem %s175, 35
      %264 = vst.msk [vmem:[%s263] ss:$8 sm:$0x3] %vm188, %v257
      %265 = vst.msk [vmem:[%s263] ss:$8 sm:$0x0] %vm188, %v257
      %v266 = vld [vmem:[%s194] ss:$4 sm:$0x7]
      %v267 = vld [vmem:[%s196] ss:$4 sm:$0x7]
      %s268 = scalar_lea.vmem %s168, 4
      %v269 = vld [vmem:[%s268] ss:$8 sm:$0x3]
      %s270 = scalar_lea.vmem %s168, 36
      %v271 = vld [vmem:[%s270] ss:$8 sm:$0x3]
      %274 = vrot.lane.b32.xlu0 %v269, 16
      %v275 = vpop.permute.xlu0 %274
      %276 = vrot.lane.b32.xlu0 %v271, 16
      %v277 = vpop.permute.xlu0 %276
      %v278 = vrot.slane %v275, 7
      %v279 = vrot.slane %v277, 7
      %v280 = vsel %vm240, %v278, %v275
      %v281 = vsel %vm240, %v279, %v277
      %v284 = vmul.f32 %v266, %v280
      %v285 = vmul.f32 %v267, %v281
      %288 = vrot.lane.b32.xlu0 %v284, 112
      %v289 = vpop.permute.xlu0 %288
      %290 = vrot.lane.b32.xlu0 %v285, 112
      %v291 = vpop.permute.xlu0 %290
      %v292 = vrot.slane %v289, 1
      %v293 = vrot.slane %v291, 1
      %v294 = vsel %vm255, %v289, %v292
      %v295 = vsel %vm255, %v291, %v293
      %s298 = scalar_lea.vmem %s175, 4
      %299 = vst.msk [vmem:[%s298] ss:$8 sm:$0x3] %vm188, %v294
      %300 = vst.msk [vmem:[%s298] ss:$8 sm:$0x0] %vm188, %v294
      %s301 = scalar_lea.vmem %s175, 36
      %302 = vst.msk [vmem:[%s301] ss:$8 sm:$0x3] %vm188, %v295
      %303 = vst.msk [vmem:[%s301] ss:$8 sm:$0x0] %vm188, %v295
      %v304 = vld [vmem:[%s210] ss:$4 sm:$0x7]
      %v305 = vld [vmem:[%s212] ss:$4 sm:$0x7]
      %s306 = scalar_lea.vmem %s168, 5
      %v307 = vld [vmem:[%s306] ss:$8 sm:$0x3]
      %s308 = scalar_lea.vmem %s168, 37
      %v309 = vld [vmem:[%s308] ss:$8 sm:$0x3]
      %312 = vrot.lane.b32.xlu0 %v307, 16
      %v313 = vpop.permute.xlu0 %312
      %314 = vrot.lane.b32.xlu0 %v309, 16
      %v315 = vpop.permute.xlu0 %314
      %v316 = vrot.slane %v313, 7
      %v317 = vrot.slane %v315, 7
      %v318 = vsel %vm240, %v316, %v313
      %v319 = vsel %vm240, %v317, %v315
      %v322 = vmul.f32 %v304, %v318
      %v323 = vmul.f32 %v305, %v319
      %326 = vrot.lane.b32.xlu0 %v322, 112
      %v327 = vpop.permute.xlu0 %326
      %328 = vrot.lane.b32.xlu0 %v323, 112
      %v329 = vpop.permute.xlu0 %328
      %v330 = vrot.slane %v327, 1
      %v331 = vrot.slane %v329, 1
      %v332 = vsel %vm255, %v327, %v330
      %v333 = vsel %vm255, %v329, %v331
      %s336 = scalar_lea.vmem %s175, 5
      %337 = vst.msk [vmem:[%s336] ss:$8 sm:$0x3] %vm188, %v332
      %338 = vst.msk [vmem:[%s336] ss:$8 sm:$0x0] %vm188, %v332
      %s339 = scalar_lea.vmem %s175, 37
      %340 = vst.msk [vmem:[%s339] ss:$8 sm:$0x3] %vm188, %v333
      %341 = vst.msk [vmem:[%s339] ss:$8 sm:$0x0] %vm188, %v333
      %v342 = vld [vmem:[%s161] ss:$4 sm:$0x7]
      %v343 = vld [vmem:[%s178] ss:$4 sm:$0x7]
      %s344 = scalar_lea.vmem %s168, 6
      %v345 = vld [vmem:[%s344] ss:$8 sm:$0x3]
      %s346 = scalar_lea.vmem %s168, 38
      %v347 = vld [vmem:[%s346] ss:$8 sm:$0x3]
      %350 = vrot.lane.b32.xlu0 %v345, 32
      %v351 = vpop.permute.xlu0 %350
      %352 = vrot.lane.b32.xlu0 %v347, 32
      %v353 = vpop.permute.xlu0 %352
      %v354 = vrot.slane %v351, 7
      %v355 = vrot.slane %v353, 7
      %vm356 = vcmask 261120
      %v357 = vsel %vm356, %v354, %v351
      %v358 = vsel %vm356, %v355, %v353
      %v361 = vmul.f32 %v342, %v357
      %v362 = vmul.f32 %v343, %v358
      %365 = vrot.lane.b32.xlu0 %v361, 96
      %v366 = vpop.permute.xlu0 %365
      %367 = vrot.lane.b32.xlu0 %v362, 96
      %v368 = vpop.permute.xlu0 %367
      %v369 = vrot.slane %v366, 1
      %v370 = vrot.slane %v368, 1
      %vm371 = vcmask 785408
      %v372 = vsel %vm371, %v366, %v369
      %v373 = vsel %vm371, %v368, %v370
      %s376 = scalar_lea.vmem %s175, 6
      %377 = vst.msk [vmem:[%s376] ss:$8 sm:$0x3] %vm188, %v372
      %378 = vst.msk [vmem:[%s376] ss:$8 sm:$0x0] %vm188, %v372
      %s379 = scalar_lea.vmem %s175, 38
      %380 = vst.msk [vmem:[%s379] ss:$8 sm:$0x3] %vm188, %v373
      %381 = vst.msk [vmem:[%s379] ss:$8 sm:$0x0] %vm188, %v373
      %v382 = vld [vmem:[%s194] ss:$4 sm:$0x7]
      %v383 = vld [vmem:[%s196] ss:$4 sm:$0x7]
      %s384 = scalar_lea.vmem %s168, 7
      %v385 = vld [vmem:[%s384] ss:$8 sm:$0x3]
      %s386 = scalar_lea.vmem %s168, 39
      %v387 = vld [vmem:[%s386] ss:$8 sm:$0x3]
      %390 = vrot.lane.b32.xlu0 %v385, 32
      %v391 = vpop.permute.xlu0 %390
      %392 = vrot.lane.b32.xlu0 %v387, 32
      %v393 = vpop.permute.xlu0 %392
      %v394 = vrot.slane %v391, 7
      %v395 = vrot.slane %v393, 7
      %v396 = vsel %vm356, %v394, %v391
      %v397 = vsel %vm356, %v395, %v393
      %v400 = vmul.f32 %v382, %v396
      %v401 = vmul.f32 %v383, %v397
      %404 = vrot.lane.b32.xlu0 %v400, 96
      %v405 = vpop.permute.xlu0 %404
      %406 = vrot.lane.b32.xlu0 %v401, 96
      %v407 = vpop.permute.xlu0 %406
      %v408 = vrot.slane %v405, 1
      %v409 = vrot.slane %v407, 1
      %v410 = vsel %vm371, %v405, %v408
      %v411 = vsel %vm371, %v407, %v409
      %s414 = scalar_lea.vmem %s175, 7
      %415 = vst.msk [vmem:[%s414] ss:$8 sm:$0x3] %vm188, %v410
      %416 = vst.msk [vmem:[%s414] ss:$8 sm:$0x0] %vm188, %v410
      %s417 = scalar_lea.vmem %s175, 39
      %418 = vst.msk [vmem:[%s417] ss:$8 sm:$0x3] %vm188, %v411
      %419 = vst.msk [vmem:[%s417] ss:$8 sm:$0x0] %vm188, %v411
      %v420 = vld [vmem:[%s210] ss:$4 sm:$0x7]
      %v421 = vld [vmem:[%s212] ss:$4 sm:$0x7]
      %s422 = scalar_lea.vmem %s168, 16
      %v423 = vld [vmem:[%s422] ss:$8 sm:$0x3]
      %s424 = scalar_lea.vmem %s168, 48
      %v425 = vld [vmem:[%s424] ss:$8 sm:$0x3]
      %428 = vrot.lane.b32.xlu0 %v423, 32
      %v429 = vpop.permute.xlu0 %428
      %430 = vrot.lane.b32.xlu0 %v425, 32
      %v431 = vpop.permute.xlu0 %430
      %v432 = vrot.slane %v429, 7
      %v433 = vrot.slane %v431, 7
      %v434 = vsel %vm356, %v432, %v429
      %v435 = vsel %vm356, %v433, %v431
      %v438 = vmul.f32 %v420, %v434
      %v439 = vmul.f32 %v421, %v435
      %442 = vrot.lane.b32.xlu0 %v438, 96
      %v443 = vpop.permute.xlu0 %442
      %444 = vrot.lane.b32.xlu0 %v439, 96
      %v445 = vpop.permute.xlu0 %444
      %v446 = vrot.slane %v443, 1
      %v447 = vrot.slane %v445, 1
      %v448 = vsel %vm371, %v443, %v446
      %v449 = vsel %vm371, %v445, %v447
      %s452 = scalar_lea.vmem %s175, 16
      %453 = vst.msk [vmem:[%s452] ss:$8 sm:$0x3] %vm188, %v448
      %454 = vst.msk [vmem:[%s452] ss:$8 sm:$0x0] %vm188, %v448
      %s455 = scalar_lea.vmem %s175, 48
      %456 = vst.msk [vmem:[%s455] ss:$8 sm:$0x3] %vm188, %v449
      %457 = vst.msk [vmem:[%s455] ss:$8 sm:$0x0] %vm188, %v449
      %s458 = smul.u32 2, %s13
      %p459 = scmp.lt.s32.totalorder %s458, 7
      %s460 = scalar_select %p459, %s458, 7
      %s461 = smul.addr %s460, 4
      %s462 = smul.addr %s461, 8
      %s463 = scalar_lea.vmem %s2, %s462
      // Predicated region
      $region29: #{appearance_composability.1} parent=27 // pred_check
        %p464 = pneg %p83
      $region30: #{appearance_composability.1} parent=27 // pred_check_branch
        %466 = sbr.rel (%p464) target = $region32
      $region31: #{appearance_composability.1} parent=27 // pred_region
        %s467 = smul.u32 2, %s13
      $region32: #{appearance_composability.1} parent=27 // pred_fallthru
        _
    $region28: #{appearance_composability.1} parent=5 // pred_fallthru
      _
    %p468 = scmp.le.s32.totalorder 2, %s8
    // Predicated region
    $region33: #{appearance_composability.1} parent=5 // pred_check
      %p469 = pneg %p468
    $region34: #{appearance_composability.1} parent=5 // pred_check_branch
      %471 = sbr.rel (%p469) target = $region36
    $region35: #{appearance_composability.1} parent=5 // pred_region
      %s472 = ssub.s32 %s8, 2
      // Predicated region
      $region37: #{appearance_composability.1} parent=35 // pred_check
        %p473 = pneg %p89
      $region38: #{appearance_composability.1} parent=35 // pred_check_branch
        %475 = sbr.rel (%p473) target = $region40
      $region39: #{appearance_composability.1} parent=35 // pred_region
        %s476 = smul.u32 2, %s14
        %p477 = scmp.lt.s32.totalorder %s476, 7
        %s478 = scalar_select %p477, %s476, 7
        %s479 = smul.addr %s478, 4
        %s480 = smul.addr %s479, 8
        %s481 = scalar_lea.vmem %s2, %s480
      $region40: #{appearance_composability.1} parent=35 // pred_fallthru
        _
    $region36: #{appearance_composability.1} parent=5 // pred_fallthru
      _
  $region6: #{appearance_composability.1} parent=0 // loop_footer
    %s12 = sadd.s32 1, %s8
  $region7: #{appearance_composability.1} parent=0 // loop_footer_branch
    %7 = sbr.rel target = $region3
  $region8: #{appearance_composability.1} parent=0 // loop_exit
    _

</llo_original>
